<compile_context>
chip_gen: v5e
topology: v5e:2x2
jax: 0.10.0
libtpu: 0.0.40
codegen_flags: <defaults>
</compile_context>

<pallas_src>
import functools

import numpy as np
import jax
import jax.numpy as jnp
from jax.experimental import pallas as pl
from jax.experimental.pallas import tpu as pltpu

_IDX11 = np.arange(0, 32, 4)          # anchors, pair 1
_IDX12 = _IDX11 + 1                   # positives, pair 1
_IDX21 = _IDX11 + 2                   # anchors, pair 2
_IDX22 = _IDX11 + 3                   # positives, pair 2
_IDX_A = np.concatenate([_IDX11, _IDX21])   # 16 anchor rows (pair1 then pair2)
_IDX_P = np.concatenate([_IDX12, _IDX22])   # 16 positive rows


def _npair_kernel(emb_ref, w_ref, c_ref, out_ref, *, l2_reg):
    emb = emb_ref[...]                      # (32, D) f32
    c = c_ref[...]                          # (16, 128) f32 constant slab
    sel_a = c[:, 0:32]                      # (16, 32) anchor-row one-hots
    sel_p = c[:, 32:64]                     # (16, 32) positive-row one-hots
    pol_eq = c[:, 64:80]                    # (16, 16) block-diag polarity-equal
    m_own = c[:, 80:96]                     # (16, 16) own-group column counts
    m_oth = c[:, 96:112]                    # (16, 16) other-group column counts
    eye16 = c[:, 112:128]                   # (16, 16) identity

    w = w_ref[...]                          # (16, 20) gathered weight rows
    wpa = w[:, 0:2]
    wpp = w[:, 2:4]
    wea = w[:, 4:12]
    wep = w[:, 12:20]

    f32 = jnp.float32
    # Fused 16-row pipeline: rows 0:8 = (anchor1, positive1), rows 8:16 =
    # (anchor2, positive2).  Only the two 8x8 diagonal blocks of the 16x16
    # products are ever consumed (every mask below is block-diagonal).
    a16 = jnp.dot(sel_a, emb, preferred_element_type=f32)          # (16, D)
    p16 = jnp.dot(sel_p, emb, preferred_element_type=f32)          # (16, D)
    logit = jnp.dot(a16, p16.T, preferred_element_type=f32)        # (16, 16)

    wp = jnp.dot(jnp.exp(wpa), jnp.exp(wpp).T, preferred_element_type=f32)
    wp = jnp.where(pol_eq > 0, 1.0, wp)     # same-polarity override -> 1
    we = jnp.dot(jnp.exp(wea), jnp.exp(wep).T, preferred_element_type=f32)
    we = jnp.where(eye16 > 0, 1.0, we)      # diagonal override -> 1
    logit = logit * wp * we

    diag = jnp.sum(logit * eye16, axis=-1, keepdims=True)          # (16, 1)
    s_own = jnp.sum(logit * m_own, axis=-1, keepdims=True)
    s_oth = jnp.sum(logit * m_oth, axis=-1, keepdims=True)

    # 2-class N-pair CE in closed form (target is always class 0):
    #   col0 = (s_own - diag)/3, col1 = s_oth/4, CE = softplus(col1 - col0)
    z = s_oth * 0.25 - (s_own - diag) * (1.0 / 3.0)
    sp = jnp.maximum(z, 0.0) + jnp.log(1.0 + jnp.exp(-jnp.abs(z)))

    # 4-class permuted-block CE == per-row masked logsumexp minus the diagonal.
    masked = jnp.where(m_own > 0, logit, jnp.float32(-1e30))
    rmax = jnp.max(masked, axis=-1, keepdims=True)
    lse = rmax + jnp.log(jnp.sum(jnp.exp(masked - rmax), axis=-1, keepdims=True))

    ce_sum = jnp.sum(sp + lse - diag, axis=0, keepdims=True)       # (1, 1)
    l2 = jnp.sum(jnp.sum(emb * emb, axis=-1, keepdims=True),
                 axis=0, keepdims=True)                            # (1, 1)

    # loss = 0.25*(CE2_1 + CE2_2 + CE4_1 + CE4_2) + l2_reg*sum(emb^2)/64
    out_ref[...] = ce_sum * (1.0 / 32.0) + l2 * (l2_reg / 64.0)


@functools.partial(jax.jit, static_argnames=("l2_reg",))
def _npair_device(embeddings, n2, n4, cslab, cols, tgt8, *, l2_reg):
    f32 = jnp.float32
    emb = embeddings.astype(f32)
    n2f = n2.astype(f32)
    n4t = jnp.trunc(n4.astype(f32))         # torch .long() truncation
    # stride-4 row selects + target-derived column gathers (device-side XLA)
    wpa = n2f[_IDX_A][:, cols]                                    # (16, 2)
    wpp = n2f[_IDX_P][:, cols]
    wea = n4t[_IDX_A][:, tgt8]                                    # (16, 8)
    wep = n4t[_IDX_P][:, tgt8]
    wslab = jnp.concatenate([wpa, wpp, wea, wep], axis=1)         # (16, 20)

    out = pl.pallas_call(
        functools.partial(_npair_kernel, l2_reg=float(l2_reg)),
        out_shape=jax.ShapeDtypeStruct((1, 1), jnp.float32),
        in_specs=[pl.BlockSpec(memory_space=pltpu.MemorySpace.VMEM)] * 3,
        out_specs=pl.BlockSpec(memory_space=pltpu.MemorySpace.VMEM),
    )(emb, wslab, cslab.astype(f32))
    return out[0, 0]


def npair_loss(embeddings, target, n2, n4, l2_reg=0.02):
    # ---- host-side processing of `target` ONLY (the reference itself does
    #      .cpu().numpy() for the `main` scan and a python `label` loop). ----
    tgt = np.asarray(target).reshape(-1)
    tgt8 = tgt[_IDX11].astype(np.int64)
    polarity = tgt8 < 4

    # `main` 2-element boolean mask (same scan as the reference code)
    x = 0
    for x in range(polarity.shape[0] - 1):
        if (not polarity[x]) and (not polarity[x + 1]):
            pass
        else:
            break
    main_pair = [bool(polarity[x]), bool(polarity[x + 1])]
    sel = [k for k in range(2) if main_pair[k]]
    if not sel:
        # the reference's boolean-mask assignment would raise here as well
        raise ValueError("`main` mask selects no polarity column")
    if len(sel) == 1:
        sel = [sel[0], sel[0]]     # length-1 result broadcasts into both cols
    cols = np.asarray(sel, np.int32)

    # label = inverse permutation of tgt8 (label[tgt8[i]] = i)
    # NOTE: assumes target[0::4] is a permutation of 0..7, exactly as the
    #       reference's hard-coded /3 and /4 group normalisations require.
    label = np.zeros(8, np.int64)
    for i in range(8):
        label[tgt8[i]] = i

    pol_eq = (polarity[:, None] == polarity[None, :]).astype(np.float32)

    # own / other group column-count matrices: row i sums over label[0:4] or
    # label[4:8] depending on tgt8[i]; the own-group support also gives the
    # 4-class softmax columns (and contains the diagonal, since label[tgt8[i]]=i).
    m_own = np.zeros((8, 8), np.float32)
    m_oth = np.zeros((8, 8), np.float32)
    for i in range(8):
        own = label[0:4] if tgt8[i] < 4 else label[4:8]
        oth = label[4:8] if tgt8[i] < 4 else label[0:4]
        for col in own:
            m_own[i, col] += 1.0
        for col in oth:
            m_oth[i, col] += 1.0

    sel_a = np.zeros((16, 32), np.float32)
    sel_p = np.zeros((16, 32), np.float32)
    sel_a[np.arange(8), _IDX11] = 1.0
    sel_a[np.arange(8) + 8, _IDX21] = 1.0
    sel_p[np.arange(8), _IDX12] = 1.0
    sel_p[np.arange(8) + 8, _IDX22] = 1.0

    def blockdiag(m):
        out = np.zeros((16, 16), np.float32)
        out[:8, :8] = m
        out[8:, 8:] = m
        return out

    cslab = np.concatenate(
        [sel_a, sel_p, blockdiag(pol_eq), blockdiag(m_own), blockdiag(m_oth),
         np.eye(16, dtype=np.float32)], axis=1)                    # (16, 128)

    # NOTE: the reference's `(target == target.T)/rowsum` normalisation is dead
    #       code (never used downstream), so it is intentionally skipped.
    return _npair_device(embeddings, n2, n4, jnp.asarray(cslab),
                         jnp.asarray(cols), jnp.asarray(tgt8, dtype=jnp.int32),
                         l2_reg=float(l2_reg))


if __name__ == "__main__":
    key = jax.random.PRNGKey(0)
    k_emb, k_pol, k_emo = jax.random.split(key, 3)

    D = 32
    embeddings = jax.random.normal(k_emb, (32, D), dtype=jnp.float32)

    # deterministic integer labels in [0, 8); anchor positions get a permutation
    flat_t = (np.arange(32) % 8).astype(np.int32)
    flat_t[0::4] = np.array([3, 1, 5, 7, 0, 2, 6, 4], dtype=np.int32)
    target = flat_t.reshape(8, 4)          # host ints (reference pulls them to CPU anyway)

    n2 = jax.random.normal(k_pol, (32, 2), dtype=jnp.float32)          # polarity scores
    n4 = jax.random.uniform(k_emo, (32, 8), dtype=jnp.float32,
                            minval=0.0, maxval=3.0)                    # emotion scores

    loss = npair_loss(embeddings, target, n2, n4, l2_reg=0.02)
    jax.block_until_ready(loss)
    assert np.isfinite(float(loss))
    print("KERNEL_OK")
</pallas_src>

<mosaic_0001>
module attributes {stable_mosaic.version = 11 : i64} {
  func.func @_npair_kernel(%arg0: memref<32x32xf32, #tpu.memory_space<vmem>>, %arg1: memref<16x20xf32, #tpu.memory_space<vmem>>, %arg2: memref<16x128xf32, #tpu.memory_space<vmem>>, %arg3: memref<1x1xf32, #tpu.memory_space<vmem>>) attributes {dimension_semantics = [], scalar_prefetch = 0 : i64, scratch_operands = 0 : i64, tpu.core_type = #tpu.core_type<tc>} {
    %c0 = arith.constant 0 : index
    %c0_0 = arith.constant 0 : index
    %0 = vector.load %arg0[%c0, %c0_0] : memref<32x32xf32, #tpu.memory_space<vmem>>, vector<32x32xf32>
    %c0_1 = arith.constant 0 : index
    %c0_2 = arith.constant 0 : index
    %1 = vector.load %arg2[%c0_1, %c0_2] : memref<16x128xf32, #tpu.memory_space<vmem>>, vector<16x128xf32>
    %2 = vector.extract_strided_slice %1 {offsets = [0, 0], sizes = [16, 32], strides = [1, 1]} : vector<16x128xf32> to vector<16x32xf32>
    %3 = vector.extract_strided_slice %1 {offsets = [0, 32], sizes = [16, 32], strides = [1, 1]} : vector<16x128xf32> to vector<16x32xf32>
    %4 = vector.extract_strided_slice %1 {offsets = [0, 64], sizes = [16, 16], strides = [1, 1]} : vector<16x128xf32> to vector<16x16xf32>
    %5 = vector.extract_strided_slice %1 {offsets = [0, 80], sizes = [16, 16], strides = [1, 1]} : vector<16x128xf32> to vector<16x16xf32>
    %6 = vector.extract_strided_slice %1 {offsets = [0, 96], sizes = [16, 16], strides = [1, 1]} : vector<16x128xf32> to vector<16x16xf32>
    %7 = vector.extract_strided_slice %1 {offsets = [0, 112], sizes = [16, 16], strides = [1, 1]} : vector<16x128xf32> to vector<16x16xf32>
    %c0_3 = arith.constant 0 : index
    %c0_4 = arith.constant 0 : index
    %8 = vector.load %arg1[%c0_3, %c0_4] : memref<16x20xf32, #tpu.memory_space<vmem>>, vector<16x20xf32>
    %9 = vector.extract_strided_slice %8 {offsets = [0, 0], sizes = [16, 2], strides = [1, 1]} : vector<16x20xf32> to vector<16x2xf32>
    %10 = vector.extract_strided_slice %8 {offsets = [0, 2], sizes = [16, 2], strides = [1, 1]} : vector<16x20xf32> to vector<16x2xf32>
    %11 = vector.extract_strided_slice %8 {offsets = [0, 4], sizes = [16, 8], strides = [1, 1]} : vector<16x20xf32> to vector<16x8xf32>
    %12 = vector.extract_strided_slice %8 {offsets = [0, 12], sizes = [16, 8], strides = [1, 1]} : vector<16x20xf32> to vector<16x8xf32>
    %cst = arith.constant dense<0.000000e+00> : vector<16x32xf32>
    %13 = tpu.matmul %2, %0, %cst {dimension_numbers = #tpu.dot_dimension_numbers<[1], [0], [0], [1], [0, 0, 1, 1], [], []>} : vector<16x32xf32>, vector<32x32xf32>, vector<16x32xf32> -> vector<16x32xf32>
    %cst_5 = arith.constant dense<0.000000e+00> : vector<16x32xf32>
    %14 = tpu.matmul %3, %0, %cst_5 {dimension_numbers = #tpu.dot_dimension_numbers<[1], [0], [0], [1], [0, 0, 1, 1], [], []>} : vector<16x32xf32>, vector<32x32xf32>, vector<16x32xf32> -> vector<16x32xf32>
    %15 = tpu.transpose %14, [1, 0] : vector<16x32xf32> -> vector<32x16xf32>
    %cst_6 = arith.constant dense<0.000000e+00> : vector<16x16xf32>
    %16 = tpu.matmul %13, %15, %cst_6 {dimension_numbers = #tpu.dot_dimension_numbers<[1], [0], [0], [1], [0, 0, 1, 1], [], []>} : vector<16x32xf32>, vector<32x16xf32>, vector<16x16xf32> -> vector<16x16xf32>
    %17 = math.exp %9 : vector<16x2xf32>
    %18 = math.exp %10 : vector<16x2xf32>
    %19 = tpu.transpose %18, [1, 0] : vector<16x2xf32> -> vector<2x16xf32>
    %cst_7 = arith.constant dense<0.000000e+00> : vector<16x16xf32>
    %20 = tpu.matmul %17, %19, %cst_7 {dimension_numbers = #tpu.dot_dimension_numbers<[1], [0], [0], [1], [0, 0, 1, 1], [], []>} : vector<16x2xf32>, vector<2x16xf32>, vector<16x16xf32> -> vector<16x16xf32>
    %cst_8 = arith.constant 0.000000e+00 : f32
    %21 = vector.broadcast %cst_8 : f32 to vector<16x16xf32>
    %22 = arith.cmpf ogt, %4, %21 : vector<16x16xf32>
    %cst_9 = arith.constant 1.000000e+00 : f32
    %23 = vector.broadcast %cst_9 : f32 to vector<16x16xf32>
    %24 = arith.select %22, %23, %20 : vector<16x16xi1>, vector<16x16xf32>
    %25 = math.exp %11 : vector<16x8xf32>
    %26 = math.exp %12 : vector<16x8xf32>
    %27 = tpu.transpose %26, [1, 0] : vector<16x8xf32> -> vector<8x16xf32>
    %cst_10 = arith.constant dense<0.000000e+00> : vector<16x16xf32>
    %28 = tpu.matmul %25, %27, %cst_10 {dimension_numbers = #tpu.dot_dimension_numbers<[1], [0], [0], [1], [0, 0, 1, 1], [], []>} : vector<16x8xf32>, vector<8x16xf32>, vector<16x16xf32> -> vector<16x16xf32>
    %cst_11 = arith.constant 0.000000e+00 : f32
    %29 = vector.broadcast %cst_11 : f32 to vector<16x16xf32>
    %30 = arith.cmpf ogt, %7, %29 : vector<16x16xf32>
    %cst_12 = arith.constant 1.000000e+00 : f32
    %31 = vector.broadcast %cst_12 : f32 to vector<16x16xf32>
    %32 = arith.select %30, %31, %28 : vector<16x16xi1>, vector<16x16xf32>
    %33 = arith.mulf %16, %24 : vector<16x16xf32>
    %34 = arith.mulf %33, %32 : vector<16x16xf32>
    %35 = arith.mulf %34, %7 : vector<16x16xf32>
    %cst_13 = arith.constant dense<0.000000e+00> : vector<16xf32>
    %36 = vector.multi_reduction <add>, %35, %cst_13 [1] : vector<16x16xf32> to vector<16xf32>
    %37 = vector.shape_cast %36 : vector<16xf32> to vector<16x1xf32>
    %38 = arith.mulf %34, %5 : vector<16x16xf32>
    %cst_14 = arith.constant dense<0.000000e+00> : vector<16xf32>
    %39 = vector.multi_reduction <add>, %38, %cst_14 [1] : vector<16x16xf32> to vector<16xf32>
    %40 = vector.shape_cast %39 : vector<16xf32> to vector<16x1xf32>
    %41 = arith.mulf %34, %6 : vector<16x16xf32>
    %cst_15 = arith.constant dense<0.000000e+00> : vector<16xf32>
    %42 = vector.multi_reduction <add>, %41, %cst_15 [1] : vector<16x16xf32> to vector<16xf32>
    %43 = vector.shape_cast %42 : vector<16xf32> to vector<16x1xf32>
    %cst_16 = arith.constant 2.500000e-01 : f32
    %44 = vector.broadcast %cst_16 : f32 to vector<16x1xf32>
    %45 = arith.mulf %43, %44 : vector<16x1xf32>
    %46 = arith.subf %40, %37 : vector<16x1xf32>
    %cst_17 = arith.constant 0.333333343 : f32
    %47 = vector.broadcast %cst_17 : f32 to vector<16x1xf32>
    %48 = arith.mulf %46, %47 : vector<16x1xf32>
    %49 = arith.subf %45, %48 : vector<16x1xf32>
    %cst_18 = arith.constant 0.000000e+00 : f32
    %50 = vector.broadcast %cst_18 : f32 to vector<16x1xf32>
    %51 = arith.maximumf %49, %50 : vector<16x1xf32>
    %52 = math.absf %49 : vector<16x1xf32>
    %cst_19 = arith.constant 0.000000e+00 : f32
    %53 = vector.broadcast %cst_19 : f32 to vector<16x1xf32>
    %54 = arith.subf %53, %52 : vector<16x1xf32>
    %55 = math.exp %54 : vector<16x1xf32>
    %cst_20 = arith.constant 1.000000e+00 : f32
    %56 = vector.broadcast %cst_20 : f32 to vector<16x1xf32>
    %57 = arith.addf %56, %55 : vector<16x1xf32>
    %58 = math.log %57 : vector<16x1xf32>
    %59 = arith.addf %51, %58 : vector<16x1xf32>
    %cst_21 = arith.constant 0.000000e+00 : f32
    %60 = vector.broadcast %cst_21 : f32 to vector<16x16xf32>
    %61 = arith.cmpf ogt, %5, %60 : vector<16x16xf32>
    %cst_22 = arith.constant -1.000000e+30 : f32
    %62 = vector.broadcast %cst_22 : f32 to vector<16x16xf32>
    %63 = arith.select %61, %34, %62 : vector<16x16xi1>, vector<16x16xf32>
    %cst_23 = arith.constant dense<0xFF800000> : vector<16xf32>
    %64 = vector.multi_reduction <maximumf>, %63, %cst_23 [1] : vector<16x16xf32> to vector<16xf32>
    %65 = vector.shape_cast %64 : vector<16xf32> to vector<16x1xf32>
    %66 = vector.broadcast %65 : vector<16x1xf32> to vector<16x16xf32>
    %67 = arith.subf %63, %66 : vector<16x16xf32>
    %68 = math.exp %67 : vector<16x16xf32>
    %cst_24 = arith.constant dense<0.000000e+00> : vector<16xf32>
    %69 = vector.multi_reduction <add>, %68, %cst_24 [1] : vector<16x16xf32> to vector<16xf32>
    %70 = vector.shape_cast %69 : vector<16xf32> to vector<16x1xf32>
    %71 = math.log %70 : vector<16x1xf32>
    %72 = arith.addf %65, %71 : vector<16x1xf32>
    %73 = arith.addf %59, %72 : vector<16x1xf32>
    %74 = arith.subf %73, %37 : vector<16x1xf32>
    %cst_25 = arith.constant dense<0.000000e+00> : vector<1xf32>
    %75 = vector.multi_reduction <add>, %74, %cst_25 [0] : vector<16x1xf32> to vector<1xf32>
    %76 = vector.shape_cast %75 : vector<1xf32> to vector<1x1xf32>
    %77 = arith.mulf %0, %0 : vector<32x32xf32>
    %cst_26 = arith.constant dense<0.000000e+00> : vector<32xf32>
    %78 = vector.multi_reduction <add>, %77, %cst_26 [1] : vector<32x32xf32> to vector<32xf32>
    %79 = vector.shape_cast %78 : vector<32xf32> to vector<32x1xf32>
    %cst_27 = arith.constant dense<0.000000e+00> : vector<1xf32>
    %80 = vector.multi_reduction <add>, %79, %cst_27 [0] : vector<32x1xf32> to vector<1xf32>
    %81 = vector.shape_cast %80 : vector<1xf32> to vector<1x1xf32>
    %cst_28 = arith.constant 3.125000e-02 : f32
    %82 = vector.broadcast %cst_28 : f32 to vector<1x1xf32>
    %83 = arith.mulf %76, %82 : vector<1x1xf32>
    %cst_29 = arith.constant 3.125000e-04 : f32
    %84 = vector.broadcast %cst_29 : f32 to vector<1x1xf32>
    %85 = arith.mulf %81, %84 : vector<1x1xf32>
    %86 = arith.addf %83, %85 : vector<1x1xf32>
    %c0_30 = arith.constant 0 : index
    %c0_31 = arith.constant 0 : index
    %87 = vector.load %arg3[%c0_30, %c0_31] : memref<1x1xf32, #tpu.memory_space<vmem>>, vector<1x1xf32>
    tpu.vector_store %arg3[%c0_30, %c0_31], %86 {strides = array<i32>} : memref<1x1xf32, #tpu.memory_space<vmem>>, vector<1x1xf32>,
    return
  }
}

</mosaic_0001>

<llo_original>
// kernel: _npair_device.1
$region0: #{_npair_device.1}
  #allocation0 [shape = 'u32[]', space=smem, size = 0x4, offset = 0x4, fixed_abs, tag = 'smem constant byte address 0x4 - core index']
  #allocation1 [shape = 'u32[72,128]{1,0:T(1,128)}', space=vmem, size = 0x9000, scoped, tag = 'internal scratch']
  %s0 = inlined_call_operand.vmem [shape: f32[32,32], index: 0, kind: input, shape index: {}]
  %s1 = inlined_call_operand.vmem [shape: f32[16,20], index: 1, kind: input, shape index: {}]
  %s2 = inlined_call_operand.vmem [shape: f32[16,128], index: 2, kind: input, shape index: {}]
  %s3 = inlined_call_operand.hbm [shape: f32[1,1], index: 3, kind: output, shape index: {}]
  %s4 = sld [smem:[#allocation0]]
  $region22: #{_npair_device.1} parent=0
    _
  %s6 = ssub.s32 1, %s4
  %s7 = scalar_select 0, %s6, %s4
  $region1: #{_npair_device.1} parent=0
    #allocation2 [shape = 'u8[512]{0}', space=vmem, size = 0x400, scoped, tag = 'output window, operand 0, single buffered']
    #allocation3 [shape = 's32[1]{0}', space=sflag, size = 0x4, scoped, tag = 'scoped memory for _npair_device.1']
    %8 = vsyncpa [#allocation3], 0
    // Predicated region
    $region2: #{_npair_device.1} parent=1 // pred_check
      _
    $region3: #{_npair_device.1} parent=1 // pred_check_branch
      %10 = sbr.rel (0) target = $region5
    $region4: #{_npair_device.1} parent=1 // pred_region
      _
    $region5: #{_npair_device.1} parent=1 // pred_fallthru
      _
    // Predicated region
    $region6: #{_npair_device.1} parent=1 // pred_check
      _
    $region7: #{_npair_device.1} parent=1 // pred_check_branch
      %12 = sbr.rel (0) target = $region9
    $region8: #{_npair_device.1} parent=1 // pred_region
      _
    $region9: #{_npair_device.1} parent=1 // pred_fallthru
      _
    // Predicated region
    $region10: #{_npair_device.1} parent=1 // pred_check
      _
    $region11: #{_npair_device.1} parent=1 // pred_check_branch
      %14 = sbr.rel (0) target = $region13
    $region12: #{_npair_device.1} parent=1 // pred_region
      _
    $region13: #{_npair_device.1} parent=1 // pred_fallthru
      _
    %v15 = vld [vmem:[%s0] sm:$0xff]
    %v16 = vld [vmem:[%s0 + $0x8] sm:$0xff]
    %v17 = vld [vmem:[%s0 + $0x10] sm:$0xff]
    %v18 = vld [vmem:[%s0 + $0x18] sm:$0xff]
    %v19 = vld [vmem:[%s2] sm:$0xff]
    %v20 = vld [vmem:[%s2 + $0x8] sm:$0xff]
    %v21 = vld [vmem:[%s1] sm:$0xff]
    %v22 = vld [vmem:[%s1 + $0x8] sm:$0xff]
    %vm23 = vcmask 261120
    %v25 = vsel %vm23, %v19, 0
    %v28 = vsel %vm23, %v20, 0
    %30 = vmatpush.msra.mxu0 0.0
    %31 = vmatpush.msra.mxu0 0.0
    %32 = vmatpush.msra.mxu0 0.0
    %33 = vmatpush.msra.mxu0 0.0
    %34 = vmatpush.msra.mxu0 0.0
    %35 = vmatpush.msra.mxu0 0.0
    %36 = vmatpush.msra.mxu0 0.0
    %37 = vmatpush.msra.mxu0 0.0
    %38 = vmatpush.msra.mxu0 0.0
    %39 = vmatpush.msra.mxu0 0.0
    %40 = vmatpush.msra.mxu0 0.0
    %41 = vmatpush.msra.mxu0 0.0
    %42 = vmatpush.msra.mxu0 %v18
    %43 = vmatpush.msra.mxu0 %v17
    %44 = vmatpush.msra.mxu0 %v16
    %45 = vmatpush.msra.mxu0 %v15
    %46 = vmatmul.f32.gmra.mxu0 %v25
    %v47 = vpop.f32.mrf.mxu0
    %v48 = vadd.f32 0.0, %v47
    %49 = vmatmul.f32.gmra.mxu0 %v28
    %v50 = vpop.f32.mrf.mxu0
    %v51 = vadd.f32 0.0, %v50
    %52 = vdwg.mxu0
    %53 = vrot.lane.b32.xlu0 %v19, 96
    %v54 = vpop.permute.xlu0 %53
    %55 = vrot.lane.b32.xlu0 %v20, 96
    %v56 = vpop.permute.xlu0 %55
    %v57 = vsel %vm23, %v54, 0
    %v59 = vsel %vm23, %v56, 0
    %61 = vmatpush.msra.mxu0 0.0
    %62 = vmatpush.msra.mxu0 0.0
    %63 = vmatpush.msra.mxu0 0.0
    %64 = vmatpush.msra.mxu0 0.0
    %65 = vmatpush.msra.mxu0 0.0
    %66 = vmatpush.msra.mxu0 0.0
    %67 = vmatpush.msra.mxu0 0.0
    %68 = vmatpush.msra.mxu0 0.0
    %69 = vmatpush.msra.mxu0 0.0
    %70 = vmatpush.msra.mxu0 0.0
    %71 = vmatpush.msra.mxu0 0.0
    %72 = vmatpush.msra.mxu0 0.0
    %73 = vmatpush.msra.mxu0 %v18
    %74 = vmatpush.msra.mxu0 %v17
    %75 = vmatpush.msra.mxu0 %v16
    %76 = vmatpush.msra.mxu0 %v15
    %77 = vmatmul.f32.gmra.mxu0 %v57
    %v78 = vpop.f32.mrf.mxu0
    %v79 = vadd.f32 0.0, %v78
    %80 = vmatmul.f32.gmra.mxu0 %v59
    %v81 = vpop.f32.mrf.mxu0
    %v82 = vadd.f32 0.0, %v81
    %83 = vdwg.mxu0
    %v85 = vsel %vm23, %v48, 0
    %v88 = vsel %vm23, %v51, 0
    %v91 = vsel %vm23, %v79, 0
    %v94 = vsel %vm23, %v82, 0
    %96 = vmatpush.xpose.msra.mxu0 0.0
    %97 = vmatpush.xpose.msra.mxu0 0.0
    %98 = vmatpush.xpose.msra.mxu0 0.0
    %99 = vmatpush.xpose.msra.mxu0 0.0
    %100 = vmatpush.xpose.msra.mxu0 0.0
    %101 = vmatpush.xpose.msra.mxu0 0.0
    %102 = vmatpush.xpose.msra.mxu0 0.0
    %103 = vmatpush.xpose.msra.mxu0 0.0
    %104 = vmatpush.xpose.msra.mxu0 0.0
    %105 = vmatpush.xpose.msra.mxu0 0.0
    %106 = vmatpush.xpose.msra.mxu0 0.0
    %107 = vmatpush.xpose.msra.mxu0 0.0
    %108 = vmatpush.xpose.msra.mxu0 0.0
    %109 = vmatpush.xpose.msra.mxu0 0.0
    %110 = vmatpush.xpose.msra.mxu0 %v94
    %111 = vmatpush.xpose.msra.mxu0 %v91
    %112 = vmatmul.f32.gmra.mxu0 %v85
    %v113 = vpop.f32.mrf.mxu0
    %v114 = vadd.f32 0.0, %v113
    %115 = vmatmul.f32.gmra.mxu0 %v88
    %v116 = vpop.f32.mrf.mxu0
    %v117 = vadd.f32 0.0, %v116
    %118 = vdwg.mxu0
    %v119 = vmul.f32 %v21, 1.442695
    %v120 = vpow.pop %v119
    %v121 = vmul.f32 %v22, 1.442695
    %v122 = vpow.pop %v121
    %125 = vrot.lane.b32.xlu0 %v120, 126
    %v126 = vpop.permute.xlu0 %125
    %127 = vrot.lane.b32.xlu0 %v122, 126
    %v128 = vpop.permute.xlu0 %127
    %vm129 = vcmask 15360
    %v130 = vsel %vm129, %v120, 0
    %v132 = vsel %vm129, %v122, 0
    %v134 = vsel %vm129, %v126, 0
    %v136 = vsel %vm129, %v128, 0
    %138 = vmatpush.xpose.msra.mxu0 0.0
    %139 = vmatpush.xpose.msra.mxu0 0.0
    %140 = vmatpush.xpose.msra.mxu0 0.0
    %141 = vmatpush.xpose.msra.mxu0 0.0
    %142 = vmatpush.xpose.msra.mxu0 0.0
    %143 = vmatpush.xpose.msra.mxu0 0.0
    %144 = vmatpush.xpose.msra.mxu0 0.0
    %145 = vmatpush.xpose.msra.mxu0 0.0
    %146 = vmatpush.xpose.msra.mxu0 0.0
    %147 = vmatpush.xpose.msra.mxu0 0.0
    %148 = vmatpush.xpose.msra.mxu0 0.0
    %149 = vmatpush.xpose.msra.mxu0 0.0
    %150 = vmatpush.xpose.msra.mxu0 0.0
    %151 = vmatpush.xpose.msra.mxu0 0.0
    %152 = vmatpush.xpose.msra.mxu0 %v136
    %153 = vmatpush.xpose.msra.mxu0 %v134
    %154 = vmatmul.f32.gmra.mxu0 %v130
    %v155 = vpop.f32.mrf.mxu0
    %v156 = vadd.f32 0.0, %v155
    %157 = vmatmul.f32.gmra.mxu0 %v132
    %v158 = vpop.f32.mrf.mxu0
    %v159 = vadd.f32 0.0, %v158
    %160 = vdwg.mxu0
    %vm161 = vcmp.gt.f32.partialorder %v19, 0.0
    %vm162 = vcmp.gt.f32.partialorder %v20, 0.0
    %165 = vrot.lane.b32.xlu0 %v156, 64
    %v166 = vpop.permute.xlu0 %165
    %167 = vrot.lane.b32.xlu0 %v159, 64
    %v168 = vpop.permute.xlu0 %167
    %v171 = vsel %vm161, 1.0, %v166
    %v172 = vsel %vm162, 1.0, %v168
    %173 = vrot.lane.b32.xlu0 %v120, 124
    %v174 = vpop.permute.xlu0 %173
    %175 = vrot.lane.b32.xlu0 %v122, 124
    %v176 = vpop.permute.xlu0 %175
    %177 = vrot.lane.b32.xlu0 %v120, 116
    %v178 = vpop.permute.xlu0 %177
    %179 = vrot.lane.b32.xlu0 %v122, 116
    %v180 = vpop.permute.xlu0 %179
    %vm181 = vcmask 64512
    %v182 = vsel %vm181, %v174, 0
    %v184 = vsel %vm181, %v176, 0
    %v186 = vsel %vm181, %v178, 0
    %v188 = vsel %vm181, %v180, 0
    %190 = vmatpush.xpose.msra.mxu0 0.0
    %191 = vmatpush.xpose.msra.mxu0 0.0
    %192 = vmatpush.xpose.msra.mxu0 0.0
    %193 = vmatpush.xpose.msra.mxu0 0.0
    %194 = vmatpush.xpose.msra.mxu0 0.0
    %195 = vmatpush.xpose.msra.mxu0 0.0
    %196 = vmatpush.xpose.msra.mxu0 0.0
    %197 = vmatpush.xpose.msra.mxu0 0.0
    %198 = vmatpush.xpose.msra.mxu0 0.0
    %199 = vmatpush.xpose.msra.mxu0 0.0
    %200 = vmatpush.xpose.msra.mxu0 0.0
    %201 = vmatpush.xpose.msra.mxu0 0.0
    %202 = vmatpush.xpose.msra.mxu0 0.0
    %203 = vmatpush.xpose.msra.mxu0 0.0
    %204 = vmatpush.xpose.msra.mxu0 %v188
    %205 = vmatpush.xpose.msra.mxu0 %v186
    %206 = vmatmul.f32.gmra.mxu0 %v182
    %v207 = vpop.f32.mrf.mxu0
    %v208 = vadd.f32 0.0, %v207
    %209 = vmatmul.f32.gmra.mxu0 %v184
    %v210 = vpop.f32.mrf.mxu0
    %v211 = vadd.f32 0.0, %v210
    %212 = vdwg.mxu0
    %215 = vrot.lane.b32.xlu0 %v208, 112
    %v216 = vpop.permute.xlu0 %215
    %217 = vrot.lane.b32.xlu0 %v211, 112
    %v218 = vpop.permute.xlu0 %217
    %v221 = vsel %vm161, 1.0, %v216
    %v222 = vsel %vm162, 1.0, %v218
    %225 = vrot.lane.b32.xlu0 %v171, 64
    %v226 = vpop.permute.xlu0 %225
    %227 = vrot.lane.b32.xlu0 %v172, 64
    %v228 = vpop.permute.xlu0 %227
    %v231 = vmul.f32 %v114, %v226
    %v232 = vmul.f32 %v117, %v228
    %235 = vrot.lane.b32.xlu0 %v221, 16
    %v236 = vpop.permute.xlu0 %235
    %237 = vrot.lane.b32.xlu0 %v222, 16
    %v238 = vpop.permute.xlu0 %237
    %v241 = vmul.f32 %v231, %v236
    %v242 = vmul.f32 %v232, %v238
    %243 = vrot.lane.b32.xlu0 %v19, 16
    %v244 = vpop.permute.xlu0 %243
    %245 = vrot.lane.b32.xlu0 %v20, 16
    %v246 = vpop.permute.xlu0 %245
    %v249 = vmul.f32 %v241, %v244
    %v250 = vmul.f32 %v242, %v246
    %vm251 = vcmask 130048
    %v252 = vsel %vm251, %v249, 0.0
    %253 = vadd.xlane.f32.xlu0 %v252
    %v254 = vpop.xlane.xlu0 %253
    %v255 = vsel %vm251, %v250, 0.0
    %256 = vadd.xlane.f32.xlu0 %v255
    %v257 = vpop.xlane.xlu0 %256
    %258 = vrot.lane.b32.xlu0 %v19, 48
    %v259 = vpop.permute.xlu0 %258
    %260 = vrot.lane.b32.xlu0 %v20, 48
    %v261 = vpop.permute.xlu0 %260
    %v264 = vmul.f32 %v241, %v259
    %v265 = vmul.f32 %v242, %v261
    %v266 = vsel %vm251, %v264, 0.0
    %267 = vadd.xlane.f32.xlu0 %v266
    %v268 = vpop.xlane.xlu0 %267
    %v269 = vsel %vm251, %v265, 0.0
    %270 = vadd.xlane.f32.xlu0 %v269
    %v271 = vpop.xlane.xlu0 %270
    %272 = vrot.lane.b32.xlu0 %v19, 32
    %v273 = vpop.permute.xlu0 %272
    %274 = vrot.lane.b32.xlu0 %v20, 32
    %v275 = vpop.permute.xlu0 %274
    %v278 = vmul.f32 %v241, %v273
    %v279 = vmul.f32 %v242, %v275
    %v280 = vsel %vm251, %v278, 0.0
    %281 = vadd.xlane.f32.xlu0 %v280
    %v282 = vpop.xlane.xlu0 %281
    %v283 = vsel %vm251, %v279, 0.0
    %284 = vadd.xlane.f32.xlu0 %v283
    %v285 = vpop.xlane.xlu0 %284
    %v286 = vmul.f32 %v282, 0.25
    %v287 = vmul.f32 %v285, 0.25
    %v288 = vsub.f32 %v268, %v254
    %v289 = vsub.f32 %v271, %v257
    %v290 = vmul.f32 %v288, 0.33333334
    %v291 = vmul.f32 %v289, 0.33333334
    %v292 = vsub.f32 %v286, %v290
    %v293 = vsub.f32 %v287, %v291
    %v294 = vmax.f32 %v292, 0.0
    %v295 = vmax.f32 %v293, 0.0
    %v296 = vand.u32 2147483647, %v292
    %v297 = vand.u32 2147483647, %v293
    %v298 = vsub.f32 0.0, %v296
    %v299 = vsub.f32 0.0, %v297
    %v300 = vmul.f32 %v298, 1.442695
    %v301 = vpow.pop %v300
    %v302 = vmul.f32 %v299, 1.442695
    %v303 = vpow.pop %v302
    %v304 = vadd.f32 %v301, 1.0
    %v305 = vadd.f32 %v303, 1.0
    %v306 = vlog2.pop %v304
    %v307 = vmul.f32 %v306, 0.6931472
    %v308 = vlog2.pop %v305
    %v309 = vmul.f32 %v308, 0.6931472
    %v310 = vadd.f32 %v294, %v307
    %v311 = vadd.f32 %v295, %v309
    %314 = vrot.lane.b32.xlu0 %v241, 80
    %v315 = vpop.permute.xlu0 %314
    %316 = vrot.lane.b32.xlu0 %v242, 80
    %v317 = vpop.permute.xlu0 %316
    %v320 = vsel %vm161, %v315, -1e+30
    %v321 = vsel %vm162, %v317, -1e+30
    %vm322 = vcmask 786048
    %v323 = vsel %vm322, %v320, -inf
    %324 = vmax.xlane.f32.xlu0 %v323
    %v325 = vpop.xlane.xlu0 %324
    %v326 = vsel %vm322, %v321, -inf
    %327 = vmax.xlane.f32.xlu0 %v326
    %v328 = vpop.xlane.xlu0 %327
    %v329 = vsub.f32 %v320, %v325
    %v330 = vsub.f32 %v321, %v328
    %v331 = vmul.f32 %v329, 1.442695
    %v332 = vpow.pop %v331
    %v333 = vmul.f32 %v330, 1.442695
    %v334 = vpow.pop %v333
    %337 = vrot.lane.b32.xlu0 %v332, 48
    %v338 = vpop.permute.xlu0 %337
    %339 = vrot.lane.b32.xlu0 %v334, 48
    %v340 = vpop.permute.xlu0 %339
    %v343 = vsel %vm251, %v338, 0.0
    %344 = vadd.xlane.f32.xlu0 %v343
    %v345 = vpop.xlane.xlu0 %344
    %v346 = vsel %vm251, %v340, 0.0
    %347 = vadd.xlane.f32.xlu0 %v346
    %v348 = vpop.xlane.xlu0 %347
    %v349 = vlog2.pop %v345
    %v350 = vmul.f32 %v349, 0.6931472
    %v351 = vlog2.pop %v348
    %v352 = vmul.f32 %v351, 0.6931472
    %v353 = vadd.f32 %v325, %v350
    %v354 = vadd.f32 %v328, %v352
    %v355 = vadd.f32 %v310, %v353
    %v356 = vadd.f32 %v311, %v354
    %v357 = vsub.f32 %v355, %v254
    %v358 = vsub.f32 %v356, %v257
    %v359 = vadd.f32 %v357, %v358
    %v360 = vrot.slane %v359, 4
    %v361 = vadd.f32 %v359, %v360
    %v362 = vrot.slane %v361, 2
    %v363 = vadd.f32 %v361, %v362
    %v364 = vrot.slane %v363, 1
    %v365 = vadd.f32 %v363, %v364
    %v366 = vmul.f32 %v15, %v15
    %v367 = vmul.f32 %v16, %v16
    %v368 = vmul.f32 %v17, %v17
    %v369 = vmul.f32 %v18, %v18
    %v370 = vsel %vm23, %v366, 0.0
    %371 = vadd.xlane.f32.xlu0 %v370
    %v372 = vpop.xlane.xlu0 %371
    %v373 = vsel %vm23, %v367, 0.0
    %374 = vadd.xlane.f32.xlu0 %v373
    %v375 = vpop.xlane.xlu0 %374
    %v376 = vsel %vm23, %v368, 0.0
    %377 = vadd.xlane.f32.xlu0 %v376
    %v378 = vpop.xlane.xlu0 %377
    %v379 = vsel %vm23, %v369, 0.0
    %380 = vadd.xlane.f32.xlu0 %v379
    %v381 = vpop.xlane.xlu0 %380
    %v382 = vadd.f32 %v372, %v375
    %v383 = vadd.f32 %v382, %v378
    %v384 = vadd.f32 %v383, %v381
    %v385 = vrot.slane %v384, 4
    %v386 = vadd.f32 %v384, %v385
    %v387 = vrot.slane %v386, 2
    %v388 = vadd.f32 %v386, %v387
    %v389 = vrot.slane %v388, 1
    %v390 = vadd.f32 %v388, %v389
    %v391 = vmul.f32 %v365, 0.03125
    %v392 = vmul.f32 %v390, 0.0003125
    %v393 = vadd.f32 %v391, %v392
    %vm394 = vcmask 0
    %395 = vst.msk [vmem:[#allocation2] sm:$0x1] %vm394, %v393
    // Predicated region
    $region14: #{_npair_device.1} parent=1 // pred_check
      _
    $region15: #{_npair_device.1} parent=1 // pred_check_branch
      %397 = sbr.rel (0) target = $region17
    $region16: #{_npair_device.1} parent=1 // pred_region
      %399 = vsyncadd [#allocation3], 0
      %s401 = sshll.u32 [#allocation2], 4
      %s402 = int_to_ptr.vmem [resolvable:$true] %s401
      %s403 = sshll.u32 %s3, 4
      %s404 = int_to_ptr.hbm [resolvable:$true] %s403
      %406 = dma.vmem_to_hbm [thread:$0]  %s402, 16, %s404, [#allocation3]
    $region17: #{_npair_device.1} parent=1 // pred_fallthru
      _
    // Predicated region
    $region18: #{_npair_device.1} parent=1 // pred_check
      _
    $region19: #{_npair_device.1} parent=1 // pred_check_branch
      %408 = sbr.rel (0) target = $region21
    $region20: #{_npair_device.1} parent=1 // pred_region
      %410 = dma.done [#allocation3], 16
    $region21: #{_npair_device.1} parent=1 // pred_fallthru
      _
    %411 = vsyncpa [#allocation3], 1

</llo_original>
